<compile_context>
chip_gen: v5e
topology: v5e:2x2
jax: 0.10.0
libtpu: 0.0.40
codegen_flags: <defaults>
</compile_context>

<pallas_src>
import functools

import jax
import jax.numpy as jnp
from jax.experimental import pallas as pl
from jax.experimental.pallas import tpu as pltpu


def _round_up(n: int, m: int) -> int:
    return ((n + m - 1) // m) * m


# ----------------------------------------------------------------------------
# Kernel: whole MLP fused, one batch tile per grid step.
# refs = (x_tile, w0, b0, w1, b1, ..., w_{L-1}, b_{L-1}, out_tile)
# ----------------------------------------------------------------------------
def _fused_mlp_kernel(*refs, num_layers: int):
    x_ref = refs[0]
    o_ref = refs[1 + 2 * num_layers]
    compute_dtype = x_ref.dtype

    h = x_ref[...]                                   # already compute_dtype
    for i in range(num_layers):
        w_ref = refs[1 + 2 * i]
        b_ref = refs[2 + 2 * i]
        # MXU matmul with f32 accumulation regardless of input dtype.
        y = jnp.dot(h, w_ref[...], preferred_element_type=jnp.float32)
        y = y + b_ref[...]                           # bias (1, dout) f32 epilogue
        if i < num_layers - 1:
            y = jnp.maximum(y, 0.0)
            h = y.astype(compute_dtype)              # cast only between layers
        else:
            h = y
    o_ref[...] = h.astype(o_ref.dtype)


# ----------------------------------------------------------------------------
# One-time parameter preparation (outside the per-call hot path).
# ----------------------------------------------------------------------------
def prepare_mlp_params(params, *, compute_dtype=jnp.bfloat16):
    """Pad features to x128 lanes, cast weights to compute_dtype, biases to f32.

    params: list of (W (din, dout), b (dout,)) with W stored input-major so
    y = x @ W + b matches PyTorch nn.Linear (y = x @ W_pt.T + b).
    Zero padding keeps the math exact.
    """
    padded = []
    prev_pad = _round_up(params[0][0].shape[0], 128)
    for (w, b) in params:
        d_in, d_out = w.shape
        dout_pad = _round_up(d_out, 128)
        w_p = jnp.pad(w.astype(compute_dtype),
                      ((0, prev_pad - d_in), (0, dout_pad - d_out)))
        b_p = jnp.pad(b.astype(jnp.float32),
                      (0, dout_pad - d_out)).reshape(1, dout_pad)
        padded.append((w_p, b_p))
        prev_pad = dout_pad
    return padded


# ----------------------------------------------------------------------------
# Forward wrapper.
# ----------------------------------------------------------------------------
def mlp_forward_pallas(x, padded_params, *, out_features,
                       compute_dtype=jnp.bfloat16, batch_tile=None):
    """x: (B, Din). padded_params: output of prepare_mlp_params."""
    B, Din = x.shape
    num_layers = len(padded_params)
    din_pad = padded_params[0][0].shape[0]
    dout_pad = padded_params[-1][0].shape[1]

    # Sublane-dense batch padding: bf16 packs 2 rows/sublane -> multiple of 16.
    sublane = 16 if compute_dtype == jnp.bfloat16 else 8
    B_pad = _round_up(max(B, sublane), sublane)

    # Batch tile: whole batch for small B, 256 rows per grid step otherwise
    # (parallel grid axis -> both v7x TensorCores for big batches).
    tm = batch_tile if batch_tile is not None else min(B_pad, 256)
    tm = _round_up(tm, sublane)
    B_pad = _round_up(B_pad, tm)
    grid = (B_pad // tm,)

    x_p = x.astype(compute_dtype)
    if (B_pad, din_pad) != (B, Din):
        x_p = jnp.pad(x_p, ((0, B_pad - B), (0, din_pad - Din)))

    flat_inputs = [x_p]
    in_specs = [pl.BlockSpec((tm, din_pad), lambda i: (i, 0))]
    flops = 0
    prev_pad = din_pad
    for (w_p, b_p) in padded_params:
        d_in_p, d_out_p = w_p.shape
        flat_inputs += [w_p, b_p]
        in_specs += [
            pl.BlockSpec((d_in_p, d_out_p), lambda i: (0, 0)),
            pl.BlockSpec((1, d_out_p), lambda i: (0, 0)),
        ]
        flops += 2 * B_pad * prev_pad * d_out_p
        prev_pad = d_out_p

    out_shape = jax.ShapeDtypeStruct((B_pad, dout_pad), x.dtype)
    out_spec = pl.BlockSpec((tm, dout_pad), lambda i: (i, 0))

    bytes_accessed = sum(int(a.size) * a.dtype.itemsize for a in flat_inputs)
    bytes_accessed += B_pad * dout_pad * jnp.dtype(x.dtype).itemsize

    # Raise the scoped-VMEM limit only when the resident footprint needs it
    # (double-buffered tiles + all weights); cap at v7x's 64 MiB physical.
    param_bytes = sum(int(w.size) * w.dtype.itemsize + int(b.size) * 4
                      for (w, b) in padded_params)
    tile_bytes = (tm * din_pad + tm * dout_pad) * jnp.dtype(compute_dtype).itemsize
    needed = 2 * (param_bytes + 2 * tile_bytes)
    vmem_limit = min(needed + (1 << 20), 64 << 20) if needed > (16 << 20) else None

    kernel = functools.partial(_fused_mlp_kernel, num_layers=num_layers)

    out_p = pl.pallas_call(
        kernel,
        out_shape=out_shape,
        grid=grid,
        in_specs=in_specs,
        out_specs=out_spec,
        compiler_params=pltpu.CompilerParams(
            dimension_semantics=("parallel",),
            vmem_limit_bytes=vmem_limit),
        cost_estimate=pl.CostEstimate(flops=flops, transcendentals=0,
                                      bytes_accessed=int(bytes_accessed)),
    )(*flat_inputs)

    return out_p[:B, :out_features]


# ----------------------------------------------------------------------------
# Init + pure-JAX reference (PyTorch nn.Linear semantics).
# ----------------------------------------------------------------------------
def init_mlp_params(key, input_size, hidden_sizes, output_size):
    """Mirror nn.Linear default init (uniform +-1/sqrt(fan_in)); W is (in, out)."""
    sizes = [input_size] + list(hidden_sizes) + [output_size]
    params = []
    for i in range(len(sizes) - 1):
        fan_in, fan_out = sizes[i], sizes[i + 1]
        key, kw, kb = jax.random.split(key, 3)
        bound = 1.0 / jnp.sqrt(jnp.float32(fan_in))
        w = jax.random.uniform(kw, (fan_in, fan_out), jnp.float32, -bound, bound)
        bias = jax.random.uniform(kb, (fan_out,), jnp.float32, -bound, bound)
        params.append((w, bias))
    return params


def mlp_reference(x, params):
    n = len(params)
    h = x
    for i, (w, b) in enumerate(params):
        h = h @ w + b
        if i < n - 1:
            h = jnp.maximum(h, 0.0)
    return h


if __name__ == "__main__":
    key = jax.random.PRNGKey(0)
    k_x, k_p = jax.random.split(key)

    batch = 8
    input_size = 16
    hidden_sizes = [32, 32]
    output_size = 8

    x = jax.random.normal(k_x, (batch, input_size), jnp.float32)
    params = init_mlp_params(k_p, input_size, hidden_sizes, output_size)
    ref = mlp_reference(x, params)

    # f32 path: exact match to the reference.
    padded_f32 = prepare_mlp_params(params, compute_dtype=jnp.float32)
    fwd_f32 = jax.jit(functools.partial(mlp_forward_pallas,
                                        out_features=output_size,
                                        compute_dtype=jnp.float32))
    out = jax.block_until_ready(fwd_f32(x, padded_f32))
    assert out.shape == (batch, output_size)
    assert jnp.allclose(out, ref, atol=1e-5, rtol=1e-5)

    # Default bf16-compute / f32-accumulate path (MXU-friendly on all gens).
    padded_bf16 = prepare_mlp_params(params, compute_dtype=jnp.bfloat16)
    fwd_bf16 = jax.jit(functools.partial(mlp_forward_pallas,
                                         out_features=output_size,
                                         compute_dtype=jnp.bfloat16))
    out_bf16 = jax.block_until_ready(fwd_bf16(x, padded_bf16))
    assert out_bf16.shape == (batch, output_size)
    assert jnp.allclose(out_bf16, ref, atol=5e-2, rtol=5e-2)

    print("KERNEL_OK")
</pallas_src>

<mosaic_0001>
module attributes {stable_mosaic.version = 11 : i64} {
  func.func @_fused_mlp_kernel(%arg0: i32, %arg1: memref<8x128xf32, #tpu.memory_space<vmem>>, %arg2: memref<128x128xf32, #tpu.memory_space<vmem>>, %arg3: memref<1x128xf32, #tpu.memory_space<vmem>>, %arg4: memref<128x128xf32, #tpu.memory_space<vmem>>, %arg5: memref<1x128xf32, #tpu.memory_space<vmem>>, %arg6: memref<128x128xf32, #tpu.memory_space<vmem>>, %arg7: memref<1x128xf32, #tpu.memory_space<vmem>>, %arg8: memref<8x128xf32, #tpu.memory_space<vmem>>) attributes {dimension_semantics = [#tpu.dimension_semantics<parallel>], iteration_bounds = array<i64: 1>, scalar_prefetch = 0 : i64, scratch_operands = 0 : i64, tpu.core_type = #tpu.core_type<tc>, window_params = [{transform_indices = @transform_0, window_bounds = array<i64: 8, 128>}, {pipeline_mode = #tpu.pipeline_mode<synchronous>, transform_indices = @transform_1, window_bounds = array<i64: 128, 128>}, {pipeline_mode = #tpu.pipeline_mode<synchronous>, transform_indices = @transform_2, window_bounds = array<i64: 1, 128>}, {pipeline_mode = #tpu.pipeline_mode<synchronous>, transform_indices = @transform_3, window_bounds = array<i64: 128, 128>}, {pipeline_mode = #tpu.pipeline_mode<synchronous>, transform_indices = @transform_4, window_bounds = array<i64: 1, 128>}, {pipeline_mode = #tpu.pipeline_mode<synchronous>, transform_indices = @transform_5, window_bounds = array<i64: 128, 128>}, {pipeline_mode = #tpu.pipeline_mode<synchronous>, transform_indices = @transform_6, window_bounds = array<i64: 1, 128>}, {transform_indices = @transform_7, window_bounds = array<i64: 8, 128>}]} {
    %c0 = arith.constant 0 : index
    %c0_0 = arith.constant 0 : index
    %0 = vector.load %arg1[%c0, %c0_0] : memref<8x128xf32, #tpu.memory_space<vmem>>, vector<8x128xf32>
    %c0_1 = arith.constant 0 : index
    %c0_2 = arith.constant 0 : index
    %1 = vector.load %arg2[%c0_1, %c0_2] : memref<128x128xf32, #tpu.memory_space<vmem>>, vector<128x128xf32>
    %cst = arith.constant dense<0.000000e+00> : vector<8x128xf32>
    %2 = tpu.matmul %0, %1, %cst {dimension_numbers = #tpu.dot_dimension_numbers<[1], [0], [0], [1], [0, 0, 1, 1], [], []>} : vector<8x128xf32>, vector<128x128xf32>, vector<8x128xf32> -> vector<8x128xf32>
    %c0_3 = arith.constant 0 : index
    %c0_4 = arith.constant 0 : index
    %3 = vector.load %arg3[%c0_3, %c0_4] : memref<1x128xf32, #tpu.memory_space<vmem>>, vector<1x128xf32>
    %4 = vector.broadcast %3 : vector<1x128xf32> to vector<8x128xf32>
    %5 = arith.addf %2, %4 : vector<8x128xf32>
    %cst_5 = arith.constant 0.000000e+00 : f32
    %6 = vector.broadcast %cst_5 : f32 to vector<8x128xf32>
    %7 = arith.maximumf %5, %6 : vector<8x128xf32>
    %c0_6 = arith.constant 0 : index
    %c0_7 = arith.constant 0 : index
    %8 = vector.load %arg4[%c0_6, %c0_7] : memref<128x128xf32, #tpu.memory_space<vmem>>, vector<128x128xf32>
    %cst_8 = arith.constant dense<0.000000e+00> : vector<8x128xf32>
    %9 = tpu.matmul %7, %8, %cst_8 {dimension_numbers = #tpu.dot_dimension_numbers<[1], [0], [0], [1], [0, 0, 1, 1], [], []>} : vector<8x128xf32>, vector<128x128xf32>, vector<8x128xf32> -> vector<8x128xf32>
    %c0_9 = arith.constant 0 : index
    %c0_10 = arith.constant 0 : index
    %10 = vector.load %arg5[%c0_9, %c0_10] : memref<1x128xf32, #tpu.memory_space<vmem>>, vector<1x128xf32>
    %11 = vector.broadcast %10 : vector<1x128xf32> to vector<8x128xf32>
    %12 = arith.addf %9, %11 : vector<8x128xf32>
    %cst_11 = arith.constant 0.000000e+00 : f32
    %13 = vector.broadcast %cst_11 : f32 to vector<8x128xf32>
    %14 = arith.maximumf %12, %13 : vector<8x128xf32>
    %c0_12 = arith.constant 0 : index
    %c0_13 = arith.constant 0 : index
    %15 = vector.load %arg6[%c0_12, %c0_13] : memref<128x128xf32, #tpu.memory_space<vmem>>, vector<128x128xf32>
    %cst_14 = arith.constant dense<0.000000e+00> : vector<8x128xf32>
    %16 = tpu.matmul %14, %15, %cst_14 {dimension_numbers = #tpu.dot_dimension_numbers<[1], [0], [0], [1], [0, 0, 1, 1], [], []>} : vector<8x128xf32>, vector<128x128xf32>, vector<8x128xf32> -> vector<8x128xf32>
    %c0_15 = arith.constant 0 : index
    %c0_16 = arith.constant 0 : index
    %17 = vector.load %arg7[%c0_15, %c0_16] : memref<1x128xf32, #tpu.memory_space<vmem>>, vector<1x128xf32>
    %18 = vector.broadcast %17 : vector<1x128xf32> to vector<8x128xf32>
    %19 = arith.addf %16, %18 : vector<8x128xf32>
    %c0_17 = arith.constant 0 : index
    %c0_18 = arith.constant 0 : index
    %20 = vector.load %arg8[%c0_17, %c0_18] : memref<8x128xf32, #tpu.memory_space<vmem>>, vector<8x128xf32>
    tpu.vector_store %arg8[%c0_17, %c0_18], %19 {strides = array<i32>} : memref<8x128xf32, #tpu.memory_space<vmem>>, vector<8x128xf32>,
    return
  }
  func.func @transform_0(%arg0: i32) -> (i32, i32) {
    %c0_i32 = arith.constant 0 : i32
    %c0_i32_0 = arith.constant 0 : i32
    return %arg0, %c0_i32 : i32, i32
  }
  func.func @transform_1(%arg0: i32) -> (i32, i32) {
    %c0_i32 = arith.constant 0 : i32
    %c0_i32_0 = arith.constant 0 : i32
    %c0_i32_1 = arith.constant 0 : i32
    return %c0_i32, %c0_i32_0 : i32, i32
  }
  func.func @transform_2(%arg0: i32) -> (i32, i32) {
    %c0_i32 = arith.constant 0 : i32
    %c0_i32_0 = arith.constant 0 : i32
    %c0_i32_1 = arith.constant 0 : i32
    return %c0_i32, %c0_i32_0 : i32, i32
  }
  func.func @transform_3(%arg0: i32) -> (i32, i32) {
    %c0_i32 = arith.constant 0 : i32
    %c0_i32_0 = arith.constant 0 : i32
    %c0_i32_1 = arith.constant 0 : i32
    return %c0_i32, %c0_i32_0 : i32, i32
  }
  func.func @transform_4(%arg0: i32) -> (i32, i32) {
    %c0_i32 = arith.constant 0 : i32
    %c0_i32_0 = arith.constant 0 : i32
    %c0_i32_1 = arith.constant 0 : i32
    return %c0_i32, %c0_i32_0 : i32, i32
  }
  func.func @transform_5(%arg0: i32) -> (i32, i32) {
    %c0_i32 = arith.constant 0 : i32
    %c0_i32_0 = arith.constant 0 : i32
    %c0_i32_1 = arith.constant 0 : i32
    return %c0_i32, %c0_i32_0 : i32, i32
  }
  func.func @transform_6(%arg0: i32) -> (i32, i32) {
    %c0_i32 = arith.constant 0 : i32
    %c0_i32_0 = arith.constant 0 : i32
    %c0_i32_1 = arith.constant 0 : i32
    return %c0_i32, %c0_i32_0 : i32, i32
  }
  func.func @transform_7(%arg0: i32) -> (i32, i32) {
    %c0_i32 = arith.constant 0 : i32
    %c0_i32_0 = arith.constant 0 : i32
    return %arg0, %c0_i32 : i32, i32
  }
}

</mosaic_0001>

<llo_original>
// kernel: mlp_forward_pallas.1
$region0: #{mlp_forward_pallas.1}
  #allocation0 [shape = 'u32[]', space=smem, size = 0x4, offset = 0x4, fixed_abs, tag = 'smem constant byte address 0x4 - core index']
  #allocation1 [shape = 'u32[72,128]{1,0:T(1,128)}', space=vmem, size = 0x9000, scoped, tag = 'internal scratch']
  %s0 = inlined_call_operand.vmem [shape: f32[8,128], index: 0, kind: input, shape index: {}]
  %s1 = inlined_call_operand.hbm [shape: f32[128,128], index: 1, kind: input, shape index: {}]
  %s2 = inlined_call_operand.vmem [shape: f32[1,128], index: 2, kind: input, shape index: {}]
  %s3 = inlined_call_operand.hbm [shape: f32[128,128], index: 3, kind: input, shape index: {}]
  %s4 = inlined_call_operand.vmem [shape: f32[1,128], index: 4, kind: input, shape index: {}]
  %s5 = inlined_call_operand.hbm [shape: f32[128,128], index: 5, kind: input, shape index: {}]
  %s6 = inlined_call_operand.vmem [shape: f32[1,128], index: 6, kind: input, shape index: {}]
  %s7 = inlined_call_operand.hbm [shape: f32[8,128], index: 7, kind: output, shape index: {}]
  %s8 = sld [smem:[#allocation0]]
  $region50: #{mlp_forward_pallas.1} parent=0
    _
  %s10 = ssub.s32 1, %s8
  %s11 = scalar_select 0, %s10, %s8
  $region1: #{mlp_forward_pallas.1} parent=0
    #allocation2 [shape = 'u8[65536]{0}', space=vmem, size = 0x10000, scoped, tag = 'input window, operand 1, single buffered']
    #allocation3 [shape = 's32[1]{0}', space=sflag, size = 0x4, scoped, tag = 'scoped memory for mlp_forward_pallas.1']
    #allocation4 [shape = 's32[1]{0}', space=sflag, size = 0x4, scoped, tag = 'scoped memory for mlp_forward_pallas.1']
    #allocation5 [shape = 'u8[65536]{0}', space=vmem, size = 0x10000, scoped, tag = 'input window, operand 3, single buffered']
    #allocation6 [shape = 's32[1]{0}', space=sflag, size = 0x4, scoped, tag = 'scoped memory for mlp_forward_pallas.1']
    #allocation7 [shape = 'u8[65536]{0}', space=vmem, size = 0x10000, scoped, tag = 'input window, operand 5, single buffered']
    #allocation8 [shape = 'u8[4096]{0}', space=vmem, size = 0x1000, scoped, tag = 'output window, operand 0, single buffered']
    %12 = vsyncpa [#allocation3], 0
    %13 = vsyncpa [#allocation6], 0
    %14 = vsyncpa [#allocation4], 0
    // Predicated region
    $region2: #{mlp_forward_pallas.1} parent=1 // pred_check
      _
    $region3: #{mlp_forward_pallas.1} parent=1 // pred_check_branch
      %16 = sbr.rel (0) target = $region5
    $region4: #{mlp_forward_pallas.1} parent=1 // pred_region
      _
    $region5: #{mlp_forward_pallas.1} parent=1 // pred_fallthru
      _
    // Predicated region
    $region6: #{mlp_forward_pallas.1} parent=1 // pred_check
      _
    $region7: #{mlp_forward_pallas.1} parent=1 // pred_check_branch
      %18 = sbr.rel (0) target = $region9
    $region8: #{mlp_forward_pallas.1} parent=1 // pred_region
      %20 = vsyncadd [#allocation3], 0
      %s21 = sshll.u32 %s1, 4
      %s22 = int_to_ptr.hbm [resolvable:$true] %s21
      %s23 = sshll.u32 [#allocation2], 4
      %s24 = int_to_ptr.vmem [resolvable:$true] %s23
      %29 = dma.hbm_to_vmem [thread:$0]  %s22, 2048, %s24, [#allocation3], 128, 128, 8
    $region9: #{mlp_forward_pallas.1} parent=1 // pred_fallthru
      _
    // Predicated region
    $region10: #{mlp_forward_pallas.1} parent=1 // pred_check
      _
    $region11: #{mlp_forward_pallas.1} parent=1 // pred_check_branch
      %31 = sbr.rel (0) target = $region13
    $region12: #{mlp_forward_pallas.1} parent=1 // pred_region
      _
    $region13: #{mlp_forward_pallas.1} parent=1 // pred_fallthru
      _
    // Predicated region
    $region14: #{mlp_forward_pallas.1} parent=1 // pred_check
      _
    $region15: #{mlp_forward_pallas.1} parent=1 // pred_check_branch
      %33 = sbr.rel (0) target = $region17
    $region16: #{mlp_forward_pallas.1} parent=1 // pred_region
      %35 = vsyncadd [#allocation6], 0
      %s36 = sshll.u32 %s3, 4
      %s37 = int_to_ptr.hbm [resolvable:$true] %s36
      %s38 = sshll.u32 [#allocation5], 4
      %s39 = int_to_ptr.vmem [resolvable:$true] %s38
      %44 = dma.hbm_to_vmem [thread:$0]  %s37, 2048, %s39, [#allocation6], 128, 128, 8
    $region17: #{mlp_forward_pallas.1} parent=1 // pred_fallthru
      _
    // Predicated region
    $region18: #{mlp_forward_pallas.1} parent=1 // pred_check
      _
    $region19: #{mlp_forward_pallas.1} parent=1 // pred_check_branch
      %46 = sbr.rel (0) target = $region21
    $region20: #{mlp_forward_pallas.1} parent=1 // pred_region
      _
    $region21: #{mlp_forward_pallas.1} parent=1 // pred_fallthru
      _
    // Predicated region
    $region22: #{mlp_forward_pallas.1} parent=1 // pred_check
      _
    $region23: #{mlp_forward_pallas.1} parent=1 // pred_check_branch
      %48 = sbr.rel (0) target = $region25
    $region24: #{mlp_forward_pallas.1} parent=1 // pred_region
      %50 = vsyncadd [#allocation6], 0
      %s51 = sshll.u32 %s5, 4
      %s52 = int_to_ptr.hbm [resolvable:$true] %s51
      %s53 = sshll.u32 [#allocation7], 4
      %s54 = int_to_ptr.vmem [resolvable:$true] %s53
      %59 = dma.hbm_to_vmem [thread:$0]  %s52, 2048, %s54, [#allocation6], 128, 128, 8
    $region25: #{mlp_forward_pallas.1} parent=1 // pred_fallthru
      _
    // Predicated region
    $region26: #{mlp_forward_pallas.1} parent=1 // pred_check
      _
    $region27: #{mlp_forward_pallas.1} parent=1 // pred_check_branch
      %61 = sbr.rel (0) target = $region29
    $region28: #{mlp_forward_pallas.1} parent=1 // pred_region
      _
    $region29: #{mlp_forward_pallas.1} parent=1 // pred_fallthru
      _
    // Predicated region
    $region30: #{mlp_forward_pallas.1} parent=1 // pred_check
      _
    $region31: #{mlp_forward_pallas.1} parent=1 // pred_check_branch
      %63 = sbr.rel (0) target = $region33
    $region32: #{mlp_forward_pallas.1} parent=1 // pred_region
      %65 = dma.done [#allocation3], 2048
    $region33: #{mlp_forward_pallas.1} parent=1 // pred_fallthru
      _
    // Predicated region
    $region34: #{mlp_forward_pallas.1} parent=1 // pred_check
      _
    $region35: #{mlp_forward_pallas.1} parent=1 // pred_check_branch
      %67 = sbr.rel (0) target = $region37
    $region36: #{mlp_forward_pallas.1} parent=1 // pred_region
      %69 = dma.done [#allocation6], 2048
    $region37: #{mlp_forward_pallas.1} parent=1 // pred_fallthru
      _
    // Predicated region
    $region38: #{mlp_forward_pallas.1} parent=1 // pred_check
      _
    $region39: #{mlp_forward_pallas.1} parent=1 // pred_check_branch
      %71 = sbr.rel (0) target = $region41
    $region40: #{mlp_forward_pallas.1} parent=1 // pred_region
      %73 = dma.done [#allocation6], 2048
    $region41: #{mlp_forward_pallas.1} parent=1 // pred_fallthru
      _
    %v74 = vld [vmem:[%s0] sm:$0xff]
    %v75 = vld [vmem:[#allocation2] sm:$0xff]
    %v76 = vld [vmem:[#allocation2 + $0x8] sm:$0xff]
    %v77 = vld [vmem:[#allocation2 + $0x10] sm:$0xff]
    %v78 = vld [vmem:[#allocation2 + $0x18] sm:$0xff]
    %v79 = vld [vmem:[#allocation2 + $0x20] sm:$0xff]
    %v80 = vld [vmem:[#allocation2 + $0x28] sm:$0xff]
    %v81 = vld [vmem:[#allocation2 + $0x30] sm:$0xff]
    %v82 = vld [vmem:[#allocation2 + $0x38] sm:$0xff]
    %v83 = vld [vmem:[#allocation2 + $0x40] sm:$0xff]
    %v84 = vld [vmem:[#allocation2 + $0x48] sm:$0xff]
    %v85 = vld [vmem:[#allocation2 + $0x50] sm:$0xff]
    %v86 = vld [vmem:[#allocation2 + $0x58] sm:$0xff]
    %v87 = vld [vmem:[#allocation2 + $0x60] sm:$0xff]
    %v88 = vld [vmem:[#allocation2 + $0x68] sm:$0xff]
    %v89 = vld [vmem:[#allocation2 + $0x70] sm:$0xff]
    %v90 = vld [vmem:[#allocation2 + $0x78] sm:$0xff]
    %v91 = vld [vmem:[%s2] sm:$0x1]
    %v93 = vperm.slane %v91, 0
    %95 = vmatpush.msra.mxu0 %v90
    %96 = vmatpush.msra.mxu0 %v89
    %97 = vmatpush.msra.mxu0 %v88
    %98 = vmatpush.msra.mxu0 %v87
    %99 = vmatpush.msra.mxu0 %v86
    %100 = vmatpush.msra.mxu0 %v85
    %101 = vmatpush.msra.mxu0 %v84
    %102 = vmatpush.msra.mxu0 %v83
    %103 = vmatpush.msra.mxu0 %v82
    %104 = vmatpush.msra.mxu0 %v81
    %105 = vmatpush.msra.mxu0 %v80
    %106 = vmatpush.msra.mxu0 %v79
    %107 = vmatpush.msra.mxu0 %v78
    %108 = vmatpush.msra.mxu0 %v77
    %109 = vmatpush.msra.mxu0 %v76
    %110 = vmatpush.msra.mxu0 %v75
    %111 = vmatmul.f32.gmra.mxu0 %v74
    %v112 = vpop.f32.mrf.mxu0
    %v113 = vadd.f32 %v93, %v112
    %114 = vdwg.mxu0
    %v115 = vmax.f32 %v113, 0.0
    %v116 = vld [vmem:[#allocation5] sm:$0xff]
    %v117 = vld [vmem:[#allocation5 + $0x8] sm:$0xff]
    %v118 = vld [vmem:[#allocation5 + $0x10] sm:$0xff]
    %v119 = vld [vmem:[#allocation5 + $0x18] sm:$0xff]
    %v120 = vld [vmem:[#allocation5 + $0x20] sm:$0xff]
    %v121 = vld [vmem:[#allocation5 + $0x28] sm:$0xff]
    %v122 = vld [vmem:[#allocation5 + $0x30] sm:$0xff]
    %v123 = vld [vmem:[#allocation5 + $0x38] sm:$0xff]
    %v124 = vld [vmem:[#allocation5 + $0x40] sm:$0xff]
    %v125 = vld [vmem:[#allocation5 + $0x48] sm:$0xff]
    %v126 = vld [vmem:[#allocation5 + $0x50] sm:$0xff]
    %v127 = vld [vmem:[#allocation5 + $0x58] sm:$0xff]
    %v128 = vld [vmem:[#allocation5 + $0x60] sm:$0xff]
    %v129 = vld [vmem:[#allocation5 + $0x68] sm:$0xff]
    %v130 = vld [vmem:[#allocation5 + $0x70] sm:$0xff]
    %v131 = vld [vmem:[#allocation5 + $0x78] sm:$0xff]
    %v132 = vld [vmem:[%s4] sm:$0x1]
    %v134 = vperm.slane %v132, 0
    %136 = vmatpush.msra.mxu0 %v131
    %137 = vmatpush.msra.mxu0 %v130
    %138 = vmatpush.msra.mxu0 %v129
    %139 = vmatpush.msra.mxu0 %v128
    %140 = vmatpush.msra.mxu0 %v127
    %141 = vmatpush.msra.mxu0 %v126
    %142 = vmatpush.msra.mxu0 %v125
    %143 = vmatpush.msra.mxu0 %v124
    %144 = vmatpush.msra.mxu0 %v123
    %145 = vmatpush.msra.mxu0 %v122
    %146 = vmatpush.msra.mxu0 %v121
    %147 = vmatpush.msra.mxu0 %v120
    %148 = vmatpush.msra.mxu0 %v119
    %149 = vmatpush.msra.mxu0 %v118
    %150 = vmatpush.msra.mxu0 %v117
    %151 = vmatpush.msra.mxu0 %v116
    %152 = vmatmul.f32.gmra.mxu0 %v115
    %v153 = vpop.f32.mrf.mxu0
    %v154 = vadd.f32 %v134, %v153
    %155 = vdwg.mxu0
    %v156 = vmax.f32 %v154, 0.0
    %v157 = vld [vmem:[#allocation7] sm:$0xff]
    %v158 = vld [vmem:[#allocation7 + $0x8] sm:$0xff]
    %v159 = vld [vmem:[#allocation7 + $0x10] sm:$0xff]
    %v160 = vld [vmem:[#allocation7 + $0x18] sm:$0xff]
    %v161 = vld [vmem:[#allocation7 + $0x20] sm:$0xff]
    %v162 = vld [vmem:[#allocation7 + $0x28] sm:$0xff]
    %v163 = vld [vmem:[#allocation7 + $0x30] sm:$0xff]
    %v164 = vld [vmem:[#allocation7 + $0x38] sm:$0xff]
    %v165 = vld [vmem:[#allocation7 + $0x40] sm:$0xff]
    %v166 = vld [vmem:[#allocation7 + $0x48] sm:$0xff]
    %v167 = vld [vmem:[#allocation7 + $0x50] sm:$0xff]
    %v168 = vld [vmem:[#allocation7 + $0x58] sm:$0xff]
    %v169 = vld [vmem:[#allocation7 + $0x60] sm:$0xff]
    %v170 = vld [vmem:[#allocation7 + $0x68] sm:$0xff]
    %v171 = vld [vmem:[#allocation7 + $0x70] sm:$0xff]
    %v172 = vld [vmem:[#allocation7 + $0x78] sm:$0xff]
    %v173 = vld [vmem:[%s6] sm:$0x1]
    %v175 = vperm.slane %v173, 0
    %177 = vmatpush.msra.mxu0 %v172
    %178 = vmatpush.msra.mxu0 %v171
    %179 = vmatpush.msra.mxu0 %v170
    %180 = vmatpush.msra.mxu0 %v169
    %181 = vmatpush.msra.mxu0 %v168
    %182 = vmatpush.msra.mxu0 %v167
    %183 = vmatpush.msra.mxu0 %v166
    %184 = vmatpush.msra.mxu0 %v165
    %185 = vmatpush.msra.mxu0 %v164
    %186 = vmatpush.msra.mxu0 %v163
    %187 = vmatpush.msra.mxu0 %v162
    %188 = vmatpush.msra.mxu0 %v161
    %189 = vmatpush.msra.mxu0 %v160
    %190 = vmatpush.msra.mxu0 %v159
    %191 = vmatpush.msra.mxu0 %v158
    %192 = vmatpush.msra.mxu0 %v157
    %193 = vmatmul.f32.gmra.mxu0 %v156
    %v194 = vpop.f32.mrf.mxu0
    %v195 = vadd.f32 %v175, %v194
    %196 = vdwg.mxu0
    %197 = vst [vmem:[#allocation8] sm:$0xff] %v195
    // Predicated region
    $region42: #{mlp_forward_pallas.1} parent=1 // pred_check
      _
    $region43: #{mlp_forward_pallas.1} parent=1 // pred_check_branch
      %199 = sbr.rel (0) target = $region45
    $region44: #{mlp_forward_pallas.1} parent=1 // pred_region
      %201 = vsyncadd [#allocation4], 0
      %s203 = sshll.u32 [#allocation8], 4
      %s204 = int_to_ptr.vmem [resolvable:$true] %s203
      %s205 = sshll.u32 %s7, 4
      %s206 = int_to_ptr.hbm [resolvable:$true] %s205
      %208 = dma.vmem_to_hbm [thread:$0]  %s204, 128, %s206, [#allocation4]
    $region45: #{mlp_forward_pallas.1} parent=1 // pred_fallthru
      _
    // Predicated region
    $region46: #{mlp_forward_pallas.1} parent=1 // pred_check
      _
    $region47: #{mlp_forward_pallas.1} parent=1 // pred_check_branch
      %210 = sbr.rel (0) target = $region49
    $region48: #{mlp_forward_pallas.1} parent=1 // pred_region
      %212 = dma.done [#allocation4], 128
    $region49: #{mlp_forward_pallas.1} parent=1 // pred_fallthru
      _
    %213 = vsyncpa [#allocation3], 1
    %214 = vsyncpa [#allocation6], 1
    %215 = vsyncpa [#allocation4], 1

</llo_original>
